<compile_context>
chip_gen: v7x
topology: tpu7x:2x2x1
jax: 0.10.0
libtpu: 0.0.40
codegen_flags: <defaults>
</compile_context>

<pallas_src>
import functools

import jax
import jax.numpy as jnp
from jax.experimental import pallas as pl
from jax.experimental.pallas import tpu as pltpu


def _round_up(x, m):
    return ((x + m - 1) // m) * m


def _focal_cosine_kernel(x_ref, t_ref, o_ref, *, alpha, gamma, batch, tb, need_mask):
    x = x_ref[...].astype(jnp.float32)   # (TB, C)
    t = t_ref[...].astype(jnp.float32)   # (TB, C)

    # ---- row reductions (XLU; N=1 contractions, intentionally NOT on MXU) ----
    dot = jnp.sum(x * t, axis=1, keepdims=True)                      # (TB, 1)
    sum_x2 = jnp.sum(x * x, axis=1, keepdims=True)                   # (TB, 1)
    sum_t2 = jnp.sum(t * t, axis=1, keepdims=True)                   # (TB, 1)

    # ---- cosine embedding loss (y=+1): 1 - dot / max(||x||*||t||, 1e-8) ----
    # rsqrt of clamped squared quantities == 1 / max(norm-product, eps).
    inv_prod = jax.lax.rsqrt(jnp.maximum(sum_x2 * sum_t2, 1e-16))
    cos_term = 1.0 - dot * inv_prod                                  # (TB, 1)

    # ---- F.normalize(input, dim=1): x / max(||x||, 1e-12) ----
    inv_xnorm = jax.lax.rsqrt(jnp.maximum(sum_x2, 1e-24))
    xn = x * inv_xnorm                                               # (TB, C)

    # ---- elementwise BCE-with-logits on the normalized input ----
    # stable form: max(z,0) - z*t + log1p(exp(-|z|))
    e = jnp.exp(-jnp.abs(xn))
    bce = jnp.maximum(xn, 0.0) - xn * t + jnp.log1p(e)
    pt = jnp.exp(-bce)

    # ---- focal modulation: (1 - pt)^gamma, specialized for integer gamma ----
    g = float(gamma)
    one_minus_pt = 1.0 - pt
    if g == 0.0:
        mod = jnp.ones_like(pt)
    elif g.is_integer() and 0.0 < g <= 8.0:
        mod = one_minus_pt
        for _ in range(int(g) - 1):
            mod = mod * one_minus_pt
    else:
        mod = one_minus_pt ** g
    focal = alpha * mod * bce                                        # (TB, C)

    # ---- mask rows added by batch padding (only if padding actually exists) ----
    if need_mask:
        i = pl.program_id(0)
        row = i * tb + jax.lax.broadcasted_iota(jnp.int32, (tb, 1), 0)
        valid = (row < batch).astype(jnp.float32)                    # (TB, 1)
        cos_partial = jnp.sum(valid * cos_term)
        focal_partial = jnp.sum(valid * focal)
    else:
        cos_partial = jnp.sum(cos_term)
        focal_partial = jnp.sum(focal)

    # ---- lane-dense (8,128) partial-sum tile: [0,0]=cosine, [0,1]=focal ----
    sub = jax.lax.broadcasted_iota(jnp.int32, (8, 128), 0)
    lane = jax.lax.broadcasted_iota(jnp.int32, (8, 128), 1)
    out_tile = jnp.where((sub == 0) & (lane == 0), cos_partial,
                         jnp.where((sub == 0) & (lane == 1), focal_partial, 0.0))
    o_ref[...] = out_tile


def focal_cosine_loss(x, target, alpha=1.0, gamma=2.0, xent=0.1, block_b=None):
    """Pallas implementation of FocalCosineLoss.forward(input, target, 'mean').

    Accepts f32 or bf16 inputs (bf16 halves HBM traffic; compute is f32 in-kernel).
    """
    assert x.ndim == 2 and x.shape == target.shape
    B, C = x.shape

    # --- pick a batch tile: multiple of 8, ~2 MiB per input block, VMEM-safe ---
    if block_b is None:
        row_bytes = max(C * 4, 1)                      # f32-conservative
        target_tb = (2 << 20) // row_bytes             # ~2 MiB per input block
        block_b = int(min(8192, max(8, target_tb), _round_up(B, 8)))
        block_b = max(8, (block_b // 8) * 8)

    B_pad = _round_up(B, block_b)
    need_mask = B_pad != B
    if need_mask:
        pad = B_pad - B
        x = jnp.pad(x, ((0, pad), (0, 0)))
        target = jnp.pad(target, ((0, pad), (0, 0)))
    n_tiles = B_pad // block_b

    kernel = functools.partial(
        _focal_cosine_kernel,
        alpha=float(alpha), gamma=float(gamma), batch=B, tb=block_b,
        need_mask=need_mask,
    )

    # explicit scoped-VMEM budget (2 inputs x 2 buffers x block + headroom),
    # safe on v5e/v6e/v7x default physical VMEM.
    vmem_bytes = int(min(32 << 20, max(8 << 20, 6 * block_b * C * 4)))

    out = pl.pallas_call(
        kernel,
        out_shape=jax.ShapeDtypeStruct((n_tiles * 8, 128), jnp.float32),
        grid=(n_tiles,),
        in_specs=[
            pl.BlockSpec((block_b, C), lambda i: (i, 0)),
            pl.BlockSpec((block_b, C), lambda i: (i, 0)),
        ],
        out_specs=pl.BlockSpec((8, 128), lambda i: (i, 0)),
        compiler_params=pltpu.CompilerParams(
            dimension_semantics=("parallel",),
            vmem_limit_bytes=vmem_bytes,
        ),
    )(x, target)

    cos_sum = jnp.sum(out[:, 0])
    focal_sum = jnp.sum(out[:, 1])
    return cos_sum / B + float(xent) * focal_sum / (B * C)


def _reference(x, t, alpha=1.0, gamma=2.0, xent=0.1):
    x = x.astype(jnp.float32)
    t = t.astype(jnp.float32)
    dot = jnp.sum(x * t, axis=1)
    xn = jnp.sqrt(jnp.sum(x * x, axis=1))
    tn = jnp.sqrt(jnp.sum(t * t, axis=1))
    cosine_loss = jnp.mean(1.0 - dot / jnp.maximum(xn * tn, 1e-8))
    z = x / jnp.maximum(xn[:, None], 1e-12)
    bce = jnp.maximum(z, 0.0) - z * t + jnp.log1p(jnp.exp(-jnp.abs(z)))
    pt = jnp.exp(-bce)
    focal = jnp.mean(alpha * (1.0 - pt) ** gamma * bce)
    return cosine_loss + xent * focal


if __name__ == "__main__":
    # Module constants (from __init__ defaults): alpha=1, gamma=2, xent=0.1.
    # No trainable parameters exist in this module.
    B, C = 8, 32
    key = jax.random.PRNGKey(0)
    k_in, k_tgt = jax.random.split(key)
    x = jax.random.normal(k_in, (B, C), dtype=jnp.float32)
    # target: soft labels in [0, 1] (BCE targets), same shape as input
    target = jax.random.uniform(k_tgt, (B, C), dtype=jnp.float32)

    loss = focal_cosine_loss(x, target, alpha=1.0, gamma=2.0, xent=0.1)
    loss = jax.block_until_ready(loss)

    ref = jax.block_until_ready(_reference(x, target))
    assert jnp.allclose(loss, ref, rtol=1e-5, atol=1e-5), (loss, ref)

    print("KERNEL_OK")
</pallas_src>

<mosaic_0001>
module attributes {stable_mosaic.version = 11 : i64} {
  func.func @_focal_cosine_kernel(%arg0: i32, %arg1: memref<8x32xf32, #tpu.memory_space<vmem>>, %arg2: memref<8x32xf32, #tpu.memory_space<vmem>>, %arg3: memref<8x128xf32, #tpu.memory_space<vmem>>) attributes {dimension_semantics = [#tpu.dimension_semantics<parallel>], iteration_bounds = array<i64: 1>, scalar_prefetch = 0 : i64, scratch_operands = 0 : i64, tpu.core_type = #tpu.core_type<tc>, window_params = [{transform_indices = @transform_0, window_bounds = array<i64: 8, 32>}, {transform_indices = @transform_1, window_bounds = array<i64: 8, 32>}, {transform_indices = @transform_2, window_bounds = array<i64: 8, 128>}]} {
    %c0 = arith.constant 0 : index
    %c0_0 = arith.constant 0 : index
    %0 = vector.load %arg1[%c0, %c0_0] : memref<8x32xf32, #tpu.memory_space<vmem>>, vector<8x32xf32>
    %c0_1 = arith.constant 0 : index
    %c0_2 = arith.constant 0 : index
    %1 = vector.load %arg2[%c0_1, %c0_2] : memref<8x32xf32, #tpu.memory_space<vmem>>, vector<8x32xf32>
    %2 = arith.mulf %0, %1 : vector<8x32xf32>
    %cst = arith.constant dense<0.000000e+00> : vector<8xf32>
    %3 = vector.multi_reduction <add>, %2, %cst [1] : vector<8x32xf32> to vector<8xf32>
    %4 = vector.shape_cast %3 : vector<8xf32> to vector<8x1xf32>
    %5 = arith.mulf %0, %0 : vector<8x32xf32>
    %cst_3 = arith.constant dense<0.000000e+00> : vector<8xf32>
    %6 = vector.multi_reduction <add>, %5, %cst_3 [1] : vector<8x32xf32> to vector<8xf32>
    %7 = vector.shape_cast %6 : vector<8xf32> to vector<8x1xf32>
    %8 = arith.mulf %1, %1 : vector<8x32xf32>
    %cst_4 = arith.constant dense<0.000000e+00> : vector<8xf32>
    %9 = vector.multi_reduction <add>, %8, %cst_4 [1] : vector<8x32xf32> to vector<8xf32>
    %10 = vector.shape_cast %9 : vector<8xf32> to vector<8x1xf32>
    %11 = arith.mulf %7, %10 : vector<8x1xf32>
    %cst_5 = arith.constant 1.000000e-16 : f32
    %12 = vector.broadcast %cst_5 : f32 to vector<8x1xf32>
    %13 = arith.maximumf %11, %12 : vector<8x1xf32>
    %14 = math.rsqrt %13 : vector<8x1xf32>
    %15 = arith.mulf %4, %14 : vector<8x1xf32>
    %cst_6 = arith.constant 1.000000e+00 : f32
    %16 = vector.broadcast %cst_6 : f32 to vector<8x1xf32>
    %17 = arith.subf %16, %15 : vector<8x1xf32>
    %cst_7 = arith.constant 1.000000e-24 : f32
    %18 = vector.broadcast %cst_7 : f32 to vector<8x1xf32>
    %19 = arith.maximumf %7, %18 : vector<8x1xf32>
    %20 = math.rsqrt %19 : vector<8x1xf32>
    %21 = vector.broadcast %20 : vector<8x1xf32> to vector<8x32xf32>
    %22 = arith.mulf %0, %21 : vector<8x32xf32>
    %23 = math.absf %22 : vector<8x32xf32>
    %cst_8 = arith.constant 0.000000e+00 : f32
    %24 = vector.broadcast %cst_8 : f32 to vector<8x32xf32>
    %25 = arith.subf %24, %23 : vector<8x32xf32>
    %26 = math.exp %25 : vector<8x32xf32>
    %cst_9 = arith.constant 0.000000e+00 : f32
    %27 = vector.broadcast %cst_9 : f32 to vector<8x32xf32>
    %28 = arith.maximumf %22, %27 : vector<8x32xf32>
    %29 = arith.mulf %22, %1 : vector<8x32xf32>
    %30 = arith.subf %28, %29 : vector<8x32xf32>
    %31 = math.log1p %26 : vector<8x32xf32>
    %32 = arith.addf %30, %31 : vector<8x32xf32>
    %cst_10 = arith.constant 0.000000e+00 : f32
    %33 = vector.broadcast %cst_10 : f32 to vector<8x32xf32>
    %34 = arith.subf %33, %32 : vector<8x32xf32>
    %35 = math.exp %34 : vector<8x32xf32>
    %cst_11 = arith.constant 1.000000e+00 : f32
    %36 = vector.broadcast %cst_11 : f32 to vector<8x32xf32>
    %37 = arith.subf %36, %35 : vector<8x32xf32>
    %38 = arith.mulf %37, %37 : vector<8x32xf32>
    %cst_12 = arith.constant 1.000000e+00 : f32
    %39 = vector.broadcast %cst_12 : f32 to vector<8x32xf32>
    %40 = arith.mulf %39, %38 : vector<8x32xf32>
    %41 = arith.mulf %40, %32 : vector<8x32xf32>
    %42 = vector.shape_cast %17 : vector<8x1xf32> to vector<1x8x1xf32>
    %cst_13 = arith.constant dense<0.000000e+00> : vector<1xf32>
    %43 = vector.multi_reduction <add>, %42, %cst_13 [1, 2] : vector<1x8x1xf32> to vector<1xf32>
    %44 = vector.shape_cast %43 : vector<1xf32> to vector<1x1x1xf32>
    %45 = vector.extract %44[0, 0, 0] : f32 from vector<1x1x1xf32>
    %46 = vector.shape_cast %41 : vector<8x32xf32> to vector<1x8x32xf32>
    %cst_14 = arith.constant dense<0.000000e+00> : vector<1xf32>
    %47 = vector.multi_reduction <add>, %46, %cst_14 [1, 2] : vector<1x8x32xf32> to vector<1xf32>
    %48 = vector.shape_cast %47 : vector<1xf32> to vector<1x1x1xf32>
    %49 = vector.extract %48[0, 0, 0] : f32 from vector<1x1x1xf32>
    %50 = tpu.iota {dimensions = array<i32: 0>} : vector<8x128xi32>
    %51 = tpu.iota {dimensions = array<i32: 1>} : vector<8x128xi32>
    %c0_i32 = arith.constant 0 : i32
    %52 = vector.broadcast %c0_i32 : i32 to vector<8x128xi32>
    %53 = arith.cmpi eq, %50, %52 : vector<8x128xi32>
    %c0_i32_15 = arith.constant 0 : i32
    %54 = vector.broadcast %c0_i32_15 : i32 to vector<8x128xi32>
    %55 = arith.cmpi eq, %51, %54 : vector<8x128xi32>
    %56 = arith.andi %53, %55 : vector<8x128xi1>
    %c0_i32_16 = arith.constant 0 : i32
    %57 = vector.broadcast %c0_i32_16 : i32 to vector<8x128xi32>
    %58 = arith.cmpi eq, %50, %57 : vector<8x128xi32>
    %c1_i32 = arith.constant 1 : i32
    %59 = vector.broadcast %c1_i32 : i32 to vector<8x128xi32>
    %60 = arith.cmpi eq, %51, %59 : vector<8x128xi32>
    %61 = arith.andi %58, %60 : vector<8x128xi1>
    %cst_17 = arith.constant 0.000000e+00 : f32
    %62 = vector.broadcast %49 : f32 to vector<8x128xf32>
    %63 = vector.broadcast %cst_17 : f32 to vector<8x128xf32>
    %64 = arith.select %61, %62, %63 : vector<8x128xi1>, vector<8x128xf32>
    %65 = vector.broadcast %45 : f32 to vector<8x128xf32>
    %66 = arith.select %56, %65, %64 : vector<8x128xi1>, vector<8x128xf32>
    %c0_18 = arith.constant 0 : index
    %c0_19 = arith.constant 0 : index
    %67 = vector.load %arg3[%c0_18, %c0_19] : memref<8x128xf32, #tpu.memory_space<vmem>>, vector<8x128xf32>
    tpu.vector_store %arg3[%c0_18, %c0_19], %66 {strides = array<i32>} : memref<8x128xf32, #tpu.memory_space<vmem>>, vector<8x128xf32>,
    return
  }
  func.func @transform_0(%arg0: i32) -> (i32, i32) {
    %c0_i32 = arith.constant 0 : i32
    %c0_i32_0 = arith.constant 0 : i32
    return %arg0, %c0_i32 : i32, i32
  }
  func.func @transform_1(%arg0: i32) -> (i32, i32) {
    %c0_i32 = arith.constant 0 : i32
    %c0_i32_0 = arith.constant 0 : i32
    return %arg0, %c0_i32 : i32, i32
  }
  func.func @transform_2(%arg0: i32) -> (i32, i32) {
    %c0_i32 = arith.constant 0 : i32
    %c0_i32_0 = arith.constant 0 : i32
    return %arg0, %c0_i32 : i32, i32
  }
}

</mosaic_0001>

<llo_original>
// kernel: tpu_custom_call.1
$region0: #{tpu_custom_call.1}
  #allocation0 [shape = 'u32[]', space=smem, size = 0x4, offset = 0x4, fixed_abs, tag = 'smem constant byte address 0x4 - core index']
  #allocation1 [shape = 'u32[144,128]{1,0:T(1,128)}', space=vmem, size = 0x12000, scoped, tag = 'internal scratch']
  %s0 = inlined_call_operand.hbm [shape: f32[8,32], index: 0, kind: input, shape index: {}]
  %s1 = inlined_call_operand.hbm [shape: f32[8,32], index: 1, kind: input, shape index: {}]
  %s2 = inlined_call_operand.hbm [shape: f32[8,128], index: 2, kind: output, shape index: {}]
  %s3 = sld [smem:[#allocation0]]
  $region26: #{tpu_custom_call.1} parent=0
    _
  %s5 = ssub.s32 1, %s3
  %s6 = scalar_select 0, %s5, %s3
  $region1: #{tpu_custom_call.1} parent=0
    #allocation2 [shape = 'u8[4096]{0}', space=vmem, size = 0x1000, scoped, tag = 'input window, operand 0, single buffered']
    #allocation3 [shape = 's32[1]{0}', space=sflag, size = 0x4, scoped, tag = 'scoped memory for tpu_custom_call.1']
    #allocation4 [shape = 's32[1]{0}', space=sflag, size = 0x4, scoped, tag = 'scoped memory for tpu_custom_call.1']
    #allocation5 [shape = 'u8[4096]{0}', space=vmem, size = 0x1000, scoped, tag = 'input window, operand 1, single buffered']
    #allocation6 [shape = 's32[1]{0}', space=sflag, size = 0x4, scoped, tag = 'scoped memory for tpu_custom_call.1']
    #allocation7 [shape = 'u8[4096]{0}', space=vmem, size = 0x1000, scoped, tag = 'output window, operand 0, single buffered']
    %7 = vsyncpa [#allocation3], 0
    %8 = vsyncpa [#allocation6], 0
    %9 = vsyncpa [#allocation4], 0
    // Predicated region
    $region2: #{tpu_custom_call.1} parent=1 // pred_check
      _
    $region3: #{tpu_custom_call.1} parent=1 // pred_check_branch
      %11 = sbr.rel (0) target = $region5
    $region4: #{tpu_custom_call.1} parent=1 // pred_region
      %s13 = ssub.s32 128, 128
      %14 = vsyncadd [#allocation3], %s13
      %s16 = sshll.u32 [#allocation2], 4
      %s17 = int_to_ptr.vmem [resolvable:$true] %s16
      %19 = dma.hbm_to_vmem [thread:$0]  %s0, 128, %s17, [#allocation3]
    $region5: #{tpu_custom_call.1} parent=1 // pred_fallthru
      _
    // Predicated region
    $region6: #{tpu_custom_call.1} parent=1 // pred_check
      _
    $region7: #{tpu_custom_call.1} parent=1 // pred_check_branch
      %21 = sbr.rel (0) target = $region9
    $region8: #{tpu_custom_call.1} parent=1 // pred_region
      %s23 = ssub.s32 128, 128
      %24 = vsyncadd [#allocation6], %s23
      %s26 = sshll.u32 [#allocation5], 4
      %s27 = int_to_ptr.vmem [resolvable:$true] %s26
      %29 = dma.hbm_to_vmem [thread:$0]  %s1, 128, %s27, [#allocation6]
    $region9: #{tpu_custom_call.1} parent=1 // pred_fallthru
      _
    // Predicated region
    $region10: #{tpu_custom_call.1} parent=1 // pred_check
      _
    $region11: #{tpu_custom_call.1} parent=1 // pred_check_branch
      %31 = sbr.rel (0) target = $region13
    $region12: #{tpu_custom_call.1} parent=1 // pred_region
      %32 = dma.done [#allocation3], 128
    $region13: #{tpu_custom_call.1} parent=1 // pred_fallthru
      _
    // Predicated region
    $region14: #{tpu_custom_call.1} parent=1 // pred_check
      _
    $region15: #{tpu_custom_call.1} parent=1 // pred_check_branch
      %34 = sbr.rel (0) target = $region17
    $region16: #{tpu_custom_call.1} parent=1 // pred_region
      %35 = dma.done [#allocation6], 128
    $region17: #{tpu_custom_call.1} parent=1 // pred_fallthru
      _
    %v36 = vld [vmem:[#allocation2] sm:$0xff]
    %v37 = vld [vmem:[#allocation5] sm:$0xff]
    %v38 = vmul.f32 %v36, %v37
    %vm39 = vcmask 261120
    %v40 = vsel %vm39, %v38, 0.0
    %41 = vadd.xlane.f32.xlu0 %v40
    %v42 = vpop.xlane.xlu0 %41
    %v43 = vmul.f32 %v36, %v36
    %v44 = vsel %vm39, %v43, 0.0
    %45 = vadd.xlane.f32.xlu0 %v44
    %v46 = vpop.xlane.xlu0 %45
    %v47 = vmul.f32 %v37, %v37
    %v48 = vsel %vm39, %v47, 0.0
    %49 = vadd.xlane.f32.xlu0 %v48
    %v50 = vpop.xlane.xlu0 %49
    %v51 = vmul.f32 %v46, %v50
    %v52 = vmax.f32 %v51, 1e-16
    %v53 = vrsqrt.pop %v52
    %v54 = vmul.f32 %v42, %v53
    %v55 = vsub.f32 1.0, %v54
    %v56 = vmax.f32 %v46, 1e-24
    %v57 = vrsqrt.pop %v56
    %v58 = vmul.f32 %v36, %v57
    %v59 = vand.u32 2147483647, %v58
    %v60 = vsub.f32 0.0, %v59
    %v61 = vmul.f32 %v60, 1.442695
    %v62 = vpow.pop %v61
    %v63 = vmax.f32 %v58, 0.0
    %v64 = vmul.f32 %v58, %v37
    %v65 = vsub.f32 %v63, %v64
    %v66 = vadd.f32 %v62, 1.0
    %v67 = vlog2.pop %v66
    %v68 = vmul.f32 %v67, 0.6931472
    %v69 = vmul.f32 -0.5, %v62
    %v70 = vadd.f32 %v69, 1.0
    %v71 = vmul.f32 %v70, %v62
    %v72 = vand.u32 2147483647, %v62
    %vm73 = vcmp.lt.f32.partialorder %v72, 0.0004427343
    %v74 = vsel %vm73, %v71, %v68
    %v75 = vadd.f32 %v65, %v74
    %v76 = vsub.f32 0.0, %v75
    %v77 = vmul.f32 %v76, 1.442695
    %v78 = vpow.pop %v77
    %v79 = vsub.f32 1.0, %v78
    %v80 = vmul.f32 %v79, %v79
    %v81 = vmul.f32 %v80, %v75
    %vm82 = vcmask 7168
    %v83 = vsel %vm82, %v55, 0.0
    %84 = vadd.xlane.f32.xlu0 %v83
    %v85 = vpop.xlane.xlu0 %84
    %v86 = vrot.slane %v85, 4
    %v87 = vadd.f32 %v85, %v86
    %v88 = vrot.slane %v87, 2
    %v89 = vadd.f32 %v87, %v88
    %v90 = vrot.slane %v89, 1
    %v91 = vadd.f32 %v89, %v90
    %s92 = vtos %v91
    %v93 = vsel %vm39, %v81, 0.0
    %94 = vadd.xlane.f32.xlu0 %v93
    %v95 = vpop.xlane.xlu0 %94
    %v96 = vrot.slane %v95, 4
    %v97 = vadd.f32 %v95, %v96
    %v98 = vrot.slane %v97, 2
    %v99 = vadd.f32 %v97, %v98
    %v100 = vrot.slane %v99, 1
    %v101 = vadd.f32 %v99, %v100
    %s102 = vtos %v101
    %v103 = vlaneseq
    %v104 = vshrl.u32 %v103, 7
    %v105 = vlaneseq
    %v106 = vand.u32 %v105, 127
    %vm107 = vcmp.eq.s32.totalorder %v104, 0
    %vm108 = vcmp.eq.s32.totalorder %v106, 0
    %vm109 = vmand %vm107, %vm108
    %vm110 = vcmp.eq.s32.totalorder %v106, 1
    %vm111 = vmand %vm107, %vm110
    %v112 = vstv %s102
    %v113 = vsel %vm111, %v112, 0.0
    %v114 = vstv %s92
    %v115 = vsel %vm109, %v114, %v113
    %116 = vst [vmem:[#allocation7] sm:$0xff] %v115
    // Predicated region
    $region18: #{tpu_custom_call.1} parent=1 // pred_check
      _
    $region19: #{tpu_custom_call.1} parent=1 // pred_check_branch
      %118 = sbr.rel (0) target = $region21
    $region20: #{tpu_custom_call.1} parent=1 // pred_region
      %s120 = ssub.s32 128, 128
      %121 = vsyncadd [#allocation4], %s120
      %s123 = sshll.u32 [#allocation7], 4
      %s124 = int_to_ptr.vmem [resolvable:$true] %s123
      %126 = dma.vmem_to_hbm [thread:$0]  %s124, 128, %s2, [#allocation4]
    $region21: #{tpu_custom_call.1} parent=1 // pred_fallthru
      _
    // Predicated region
    $region22: #{tpu_custom_call.1} parent=1 // pred_check
      _
    $region23: #{tpu_custom_call.1} parent=1 // pred_check_branch
      %128 = sbr.rel (0) target = $region25
    $region24: #{tpu_custom_call.1} parent=1 // pred_region
      %129 = dma.done [#allocation4], 128
    $region25: #{tpu_custom_call.1} parent=1 // pred_fallthru
      _
    %130 = vsyncpa [#allocation3], 1
    %131 = vsyncpa [#allocation6], 1
    %132 = vsyncpa [#allocation4], 1

</llo_original>
